<compile_context>
chip_gen: v5e
topology: v5e:2x2
jax: 0.10.0
libtpu: 0.0.40
codegen_flags: <defaults>
</compile_context>

<pallas_src>
from functools import partial

import jax
import jax.numpy as jnp
from jax.experimental import pallas as pl
from jax.experimental.pallas import tpu as pltpu


def _conv2d_kernel(w_ref, b_ref, x_ref, o_ref, *, KH, KW, OH, OW):
    # w_ref: (KH*KW,) filter taps in SMEM, b_ref: (1,) scalar bias in SMEM
    # x_ref: (H, W, BN) VMEM block (batch chunk in the lane axis)
    # o_ref: (OH, OW, BN) VMEM block
    BN = o_ref.shape[-1]
    # Fold bias into the accumulator init (saves a separate full-tile add).
    acc = jnp.full((OH, OW, BN), b_ref[0], dtype=jnp.float32)
    # Static tap loop, unrolled at trace time: each shifted window is a load
    # at a different leading/sublane address offset (no lane rotates).
    for di in range(KH):
        for dj in range(KW):
            acc = acc + w_ref[di * KW + dj] * x_ref[pl.ds(di, OH), pl.ds(dj, OW), :]
    o_ref[...] = acc


def conv2d_pallas(x_nchw, filt, bias, *, max_lane_block=512):
    """result = conv2d(x, filt) + bias  (PyTorch F.conv2d defaults: VALID, stride 1)."""
    N, C, H, W = x_nchw.shape
    assert C == 1 and filt.shape[0] == 1 and filt.shape[1] == 1, \
        "PyTorchConv2d uses a (1,1,KH,KW) filter (single in/out channel)"
    KH, KW = int(filt.shape[2]), int(filt.shape[3])
    OH, OW = H - KH + 1, W - KW + 1

    # Lane-dense batch blocking: BN is a multiple of 128, capped so the
    # double-buffered (input + output) blocks stay tiny vs. the scoped VMEM
    # limit on every chip generation (v7x has only 64 MiB physical VMEM).
    BN = min(max_lane_block, 128 * pl.cdiv(N, 128))
    n_blocks = pl.cdiv(N, BN)
    Npad = n_blocks * BN

    x = x_nchw.reshape(N, H, W).astype(jnp.float32)
    x = jnp.transpose(x, (1, 2, 0))                         # (H, W, N): batch -> lanes
    if Npad != N:
        x = jnp.pad(x, ((0, 0), (0, 0), (0, Npad - N)))
    w = filt.reshape(KH * KW).astype(jnp.float32)           # 1-D SMEM (pads to 64 B)
    b = bias.reshape(1).astype(jnp.float32)

    kernel = partial(_conv2d_kernel, KH=KH, KW=KW, OH=OH, OW=OW)

    cost = pl.CostEstimate(
        flops=2 * N * OH * OW * KH * KW,
        transcendentals=0,
        bytes_accessed=4 * (Npad * H * W + Npad * OH * OW + KH * KW + 1),
    )

    out = pl.pallas_call(
        kernel,
        out_shape=jax.ShapeDtypeStruct((OH, OW, Npad), jnp.float32),
        grid=(n_blocks,),
        in_specs=[
            pl.BlockSpec(memory_space=pltpu.SMEM),            # filter taps
            pl.BlockSpec(memory_space=pltpu.SMEM),            # scalar bias
            pl.BlockSpec((H, W, BN), lambda i: (0, 0, i)),    # batch chunk (lanes)
        ],
        out_specs=pl.BlockSpec((OH, OW, BN), lambda i: (0, 0, i)),
        compiler_params=pltpu.CompilerParams(
            dimension_semantics=("parallel",),                # shard batch over TCs (v7x)
            vmem_limit_bytes=32 * 1024 * 1024,                # explicit, ample headroom
        ),
        cost_estimate=cost,
    )(w, b, x)

    out = jnp.transpose(out[:, :, :N], (2, 0, 1))             # (N, OH, OW)
    return out.reshape(N, 1, OH, OW)


if __name__ == "__main__":
    key = jax.random.PRNGKey(0)
    k_x, k_w, k_b = jax.random.split(key, 3)

    # Module __init__: filter = randn(1, 1, filter_width, filter_height), bias = randn(1)
    filter_width, filter_height = 3, 3
    filt = jax.random.normal(k_w, (1, 1, filter_width, filter_height), jnp.float32)
    bias = jax.random.normal(k_b, (1,), jnp.float32)

    # Input NCHW with a single channel (required by the (1,1,kh,kw) filter).
    x = jax.random.normal(k_x, (2, 1, 16, 16), jnp.float32)

    out = conv2d_pallas(x, filt, bias)
    out = jax.block_until_ready(out)

    # Pure-JAX reference for validation.
    ref = jax.lax.conv_general_dilated(
        x, filt, window_strides=(1, 1), padding="VALID",
        dimension_numbers=("NCHW", "OIHW", "NCHW")) + bias[0]

    assert out.shape == (2, 1, 14, 14), out.shape
    assert jnp.allclose(out, ref, atol=1e-5, rtol=1e-5), \
        float(jnp.max(jnp.abs(out - ref)))

    print("KERNEL_OK")
</pallas_src>

<mosaic_0001>
module attributes {stable_mosaic.version = 11 : i64} {
  func.func @_conv2d_kernel(%arg0: i32, %arg1: memref<9xf32, #tpu.memory_space<smem>>, %arg2: memref<1xf32, #tpu.memory_space<smem>>, %arg3: memref<16x16x128xf32, #tpu.memory_space<vmem>>, %arg4: memref<14x14x128xf32, #tpu.memory_space<vmem>>) attributes {dimension_semantics = [#tpu.dimension_semantics<parallel>], iteration_bounds = array<i64: 1>, scalar_prefetch = 0 : i64, scratch_operands = 0 : i64, tpu.core_type = #tpu.core_type<tc>, window_params = [{transform_indices = @transform_0, window_bounds = array<i64: 9>}, {transform_indices = @transform_1, window_bounds = array<i64: 1>}, {transform_indices = @transform_2, window_bounds = array<i64: 16, 16, 128>}, {transform_indices = @transform_3, window_bounds = array<i64: 14, 14, 128>}]} {
    %c0 = arith.constant 0 : index
    %0 = memref.load %arg2[%c0] : memref<1xf32, #tpu.memory_space<smem>>
    %1 = vector.broadcast %0 : f32 to vector<14x14x128xf32>
    %c0_0 = arith.constant 0 : index
    %2 = memref.load %arg1[%c0_0] : memref<9xf32, #tpu.memory_space<smem>>
    %c0_1 = arith.constant 0 : index
    %c0_2 = arith.constant 0 : index
    %c0_3 = arith.constant 0 : index
    %3 = vector.load %arg3[%c0_1, %c0_2, %c0_3] : memref<16x16x128xf32, #tpu.memory_space<vmem>>, vector<14x14x128xf32>
    %4 = vector.broadcast %2 : f32 to vector<14x14x128xf32>
    %5 = arith.mulf %4, %3 : vector<14x14x128xf32>
    %6 = arith.addf %1, %5 : vector<14x14x128xf32>
    %c1 = arith.constant 1 : index
    %7 = memref.load %arg1[%c1] : memref<9xf32, #tpu.memory_space<smem>>
    %c0_4 = arith.constant 0 : index
    %c1_5 = arith.constant 1 : index
    %c0_6 = arith.constant 0 : index
    %8 = vector.load %arg3[%c0_4, %c1_5, %c0_6] : memref<16x16x128xf32, #tpu.memory_space<vmem>>, vector<14x14x128xf32>
    %9 = vector.broadcast %7 : f32 to vector<14x14x128xf32>
    %10 = arith.mulf %9, %8 : vector<14x14x128xf32>
    %11 = arith.addf %6, %10 : vector<14x14x128xf32>
    %c2 = arith.constant 2 : index
    %12 = memref.load %arg1[%c2] : memref<9xf32, #tpu.memory_space<smem>>
    %c0_7 = arith.constant 0 : index
    %c2_8 = arith.constant 2 : index
    %c0_9 = arith.constant 0 : index
    %13 = vector.load %arg3[%c0_7, %c2_8, %c0_9] : memref<16x16x128xf32, #tpu.memory_space<vmem>>, vector<14x14x128xf32>
    %14 = vector.broadcast %12 : f32 to vector<14x14x128xf32>
    %15 = arith.mulf %14, %13 : vector<14x14x128xf32>
    %16 = arith.addf %11, %15 : vector<14x14x128xf32>
    %c3 = arith.constant 3 : index
    %17 = memref.load %arg1[%c3] : memref<9xf32, #tpu.memory_space<smem>>
    %c1_10 = arith.constant 1 : index
    %c0_11 = arith.constant 0 : index
    %c0_12 = arith.constant 0 : index
    %18 = vector.load %arg3[%c1_10, %c0_11, %c0_12] : memref<16x16x128xf32, #tpu.memory_space<vmem>>, vector<14x14x128xf32>
    %19 = vector.broadcast %17 : f32 to vector<14x14x128xf32>
    %20 = arith.mulf %19, %18 : vector<14x14x128xf32>
    %21 = arith.addf %16, %20 : vector<14x14x128xf32>
    %c4 = arith.constant 4 : index
    %22 = memref.load %arg1[%c4] : memref<9xf32, #tpu.memory_space<smem>>
    %c1_13 = arith.constant 1 : index
    %c1_14 = arith.constant 1 : index
    %c0_15 = arith.constant 0 : index
    %23 = vector.load %arg3[%c1_13, %c1_14, %c0_15] : memref<16x16x128xf32, #tpu.memory_space<vmem>>, vector<14x14x128xf32>
    %24 = vector.broadcast %22 : f32 to vector<14x14x128xf32>
    %25 = arith.mulf %24, %23 : vector<14x14x128xf32>
    %26 = arith.addf %21, %25 : vector<14x14x128xf32>
    %c5 = arith.constant 5 : index
    %27 = memref.load %arg1[%c5] : memref<9xf32, #tpu.memory_space<smem>>
    %c1_16 = arith.constant 1 : index
    %c2_17 = arith.constant 2 : index
    %c0_18 = arith.constant 0 : index
    %28 = vector.load %arg3[%c1_16, %c2_17, %c0_18] : memref<16x16x128xf32, #tpu.memory_space<vmem>>, vector<14x14x128xf32>
    %29 = vector.broadcast %27 : f32 to vector<14x14x128xf32>
    %30 = arith.mulf %29, %28 : vector<14x14x128xf32>
    %31 = arith.addf %26, %30 : vector<14x14x128xf32>
    %c6 = arith.constant 6 : index
    %32 = memref.load %arg1[%c6] : memref<9xf32, #tpu.memory_space<smem>>
    %c2_19 = arith.constant 2 : index
    %c0_20 = arith.constant 0 : index
    %c0_21 = arith.constant 0 : index
    %33 = vector.load %arg3[%c2_19, %c0_20, %c0_21] : memref<16x16x128xf32, #tpu.memory_space<vmem>>, vector<14x14x128xf32>
    %34 = vector.broadcast %32 : f32 to vector<14x14x128xf32>
    %35 = arith.mulf %34, %33 : vector<14x14x128xf32>
    %36 = arith.addf %31, %35 : vector<14x14x128xf32>
    %c7 = arith.constant 7 : index
    %37 = memref.load %arg1[%c7] : memref<9xf32, #tpu.memory_space<smem>>
    %c2_22 = arith.constant 2 : index
    %c1_23 = arith.constant 1 : index
    %c0_24 = arith.constant 0 : index
    %38 = vector.load %arg3[%c2_22, %c1_23, %c0_24] : memref<16x16x128xf32, #tpu.memory_space<vmem>>, vector<14x14x128xf32>
    %39 = vector.broadcast %37 : f32 to vector<14x14x128xf32>
    %40 = arith.mulf %39, %38 : vector<14x14x128xf32>
    %41 = arith.addf %36, %40 : vector<14x14x128xf32>
    %c8 = arith.constant 8 : index
    %42 = memref.load %arg1[%c8] : memref<9xf32, #tpu.memory_space<smem>>
    %c2_25 = arith.constant 2 : index
    %c2_26 = arith.constant 2 : index
    %c0_27 = arith.constant 0 : index
    %43 = vector.load %arg3[%c2_25, %c2_26, %c0_27] : memref<16x16x128xf32, #tpu.memory_space<vmem>>, vector<14x14x128xf32>
    %44 = vector.broadcast %42 : f32 to vector<14x14x128xf32>
    %45 = arith.mulf %44, %43 : vector<14x14x128xf32>
    %46 = arith.addf %41, %45 : vector<14x14x128xf32>
    %c0_28 = arith.constant 0 : index
    %c0_29 = arith.constant 0 : index
    %c0_30 = arith.constant 0 : index
    %47 = vector.load %arg4[%c0_28, %c0_29, %c0_30] : memref<14x14x128xf32, #tpu.memory_space<vmem>>, vector<14x14x128xf32>
    tpu.vector_store %arg4[%c0_28, %c0_29, %c0_30], %46 {strides = array<i32>} : memref<14x14x128xf32, #tpu.memory_space<vmem>>, vector<14x14x128xf32>,
    return
  }
  func.func @transform_0(%arg0: i32) -> i32 {
    %c0_i32 = arith.constant 0 : i32
    %c0_i32_0 = arith.constant 0 : i32
    return %c0_i32 : i32
  }
  func.func @transform_1(%arg0: i32) -> i32 {
    %c0_i32 = arith.constant 0 : i32
    %c0_i32_0 = arith.constant 0 : i32
    return %c0_i32 : i32
  }
  func.func @transform_2(%arg0: i32) -> (i32, i32, i32) {
    %c0_i32 = arith.constant 0 : i32
    %c0_i32_0 = arith.constant 0 : i32
    %c0_i32_1 = arith.constant 0 : i32
    return %c0_i32, %c0_i32_0, %arg0 : i32, i32, i32
  }
  func.func @transform_3(%arg0: i32) -> (i32, i32, i32) {
    %c0_i32 = arith.constant 0 : i32
    %c0_i32_0 = arith.constant 0 : i32
    %c0_i32_1 = arith.constant 0 : i32
    return %c0_i32, %c0_i32_0, %arg0 : i32, i32, i32
  }
}

</mosaic_0001>

<llo_original>
// kernel: tpu_custom_call.1
$region0: #{tpu_custom_call.1}
  #allocation0 [shape = 'u32[]', space=smem, size = 0x4, offset = 0x4, fixed_abs, tag = 'smem constant byte address 0x4 - core index']
  #allocation1 [shape = 'u32[72,128]{1,0:T(1,128)}', space=vmem, size = 0x9000, scoped, tag = 'internal scratch']
  #allocation2 [shape = 'f32[1]{0:T(128)S(6)}', space=smem, size = 0x200, scoped, tag = 'scoped memory for tpu_custom_call.1']
  %s0 = inlined_call_operand.vmem [shape: f32[9], index: 0, kind: input, shape index: {}]
  %s1 = inlined_call_operand.<no memory space> [shape: f32[1], index: 1, kind: input, shape index: {}]
  %s2 = inlined_call_operand.hbm [shape: f32[16,16,128], index: 2, kind: input, shape index: {}]
  %s3 = inlined_call_operand.hbm [shape: f32[14,14,128], index: 3, kind: output, shape index: {}]
  %s4 = sld [smem:[#allocation0]]
  $region30: #{tpu_custom_call.1} parent=0
    _
  %s6 = ssub.s32 1, %s4
  %s7 = scalar_select 0, %s6, %s4
  %8 = sst [smem:[#allocation2]] %s1
  $region1: #{tpu_custom_call.1} parent=0
    #allocation3 [shape = 'u8[512]{0}', space=smem, size = 0x200, scoped, tag = 'input window, operand 0, single buffered']
    #allocation4 [shape = 's32[1]{0}', space=sflag, size = 0x4, scoped, tag = 'scoped memory for tpu_custom_call.1']
    #allocation5 [shape = 's32[1]{0}', space=sflag, size = 0x4, scoped, tag = 'scoped memory for tpu_custom_call.1']
    #allocation6 [shape = 's32[1]{0}', space=sflag, size = 0x4, scoped, tag = 'scoped memory for tpu_custom_call.1']
    #allocation7 [shape = 'u8[131072]{0}', space=vmem, size = 0x20000, scoped, tag = 'input window, operand 2, single buffered']
    #allocation8 [shape = 'u8[114688]{0}', space=vmem, size = 0x1c000, scoped, tag = 'output window, operand 0, single buffered']
    %9 = vsyncpa [#allocation6], 0
    %10 = vsyncpa [#allocation4], 0
    %11 = vsyncpa [#allocation5], 0
    // Predicated region
    $region2: #{tpu_custom_call.1} parent=1 // pred_check
      _
    $region3: #{tpu_custom_call.1} parent=1 // pred_check_branch
      %13 = sbr.rel (0) target = $region5
    $region4: #{tpu_custom_call.1} parent=1 // pred_region
      %15 = vsyncadd [#allocation6], 0
      %s17 = sshll.u32 %s0, 4
      %s18 = int_to_ptr.vmem [resolvable:$true] %s17
      %20 = dma.vmem_to_smem %s18, 16, [#allocation3], [#allocation6]
    $region5: #{tpu_custom_call.1} parent=1 // pred_fallthru
      _
    // Predicated region
    $region6: #{tpu_custom_call.1} parent=1 // pred_check
      _
    $region7: #{tpu_custom_call.1} parent=1 // pred_check_branch
      %22 = sbr.rel (0) target = $region9
    $region8: #{tpu_custom_call.1} parent=1 // pred_region
      _
    $region9: #{tpu_custom_call.1} parent=1 // pred_fallthru
      _
    // Predicated region
    $region10: #{tpu_custom_call.1} parent=1 // pred_check
      _
    $region11: #{tpu_custom_call.1} parent=1 // pred_check_branch
      %24 = sbr.rel (0) target = $region13
    $region12: #{tpu_custom_call.1} parent=1 // pred_region
      %26 = vsyncadd [#allocation4], 0
      %s27 = sshll.u32 %s2, 4
      %s28 = int_to_ptr.hbm [resolvable:$true] %s27
      %s29 = sshll.u32 [#allocation7], 4
      %s30 = int_to_ptr.vmem [resolvable:$true] %s29
      %35 = dma.hbm_to_vmem [thread:$0]  %s28, 4096, %s30, [#allocation4], 128, 128, 8
    $region13: #{tpu_custom_call.1} parent=1 // pred_fallthru
      _
    // Predicated region
    $region14: #{tpu_custom_call.1} parent=1 // pred_check
      _
    $region15: #{tpu_custom_call.1} parent=1 // pred_check_branch
      %37 = sbr.rel (0) target = $region17
    $region16: #{tpu_custom_call.1} parent=1 // pred_region
      %39 = dma.done [#allocation6], 16
    $region17: #{tpu_custom_call.1} parent=1 // pred_fallthru
      _
    // Predicated region
    $region18: #{tpu_custom_call.1} parent=1 // pred_check
      _
    $region19: #{tpu_custom_call.1} parent=1 // pred_check_branch
      %41 = sbr.rel (0) target = $region21
    $region20: #{tpu_custom_call.1} parent=1 // pred_region
      %43 = dma.done [#allocation4], 4096
    $region21: #{tpu_custom_call.1} parent=1 // pred_fallthru
      _
    %44 = sfence
    %s45 = sld [smem:[#allocation2]]
    %v46 = vstv %s45
    %s47 = sld [smem:[#allocation3]]
    %v48 = vld [vmem:[#allocation7] sm:$0xff]
    %v49 = vld [vmem:[#allocation7 + $0x8] sm:$0x3f]
    %v50 = vld [vmem:[#allocation7 + $0x10] sm:$0xff]
    %v51 = vld [vmem:[#allocation7 + $0x18] sm:$0x3f]
    %v52 = vld [vmem:[#allocation7 + $0x20] sm:$0xff]
    %v53 = vld [vmem:[#allocation7 + $0x28] sm:$0x3f]
    %v54 = vld [vmem:[#allocation7 + $0x30] sm:$0xff]
    %v55 = vld [vmem:[#allocation7 + $0x38] sm:$0x3f]
    %v56 = vld [vmem:[#allocation7 + $0x40] sm:$0xff]
    %v57 = vld [vmem:[#allocation7 + $0x48] sm:$0x3f]
    %v58 = vld [vmem:[#allocation7 + $0x50] sm:$0xff]
    %v59 = vld [vmem:[#allocation7 + $0x58] sm:$0x3f]
    %v60 = vld [vmem:[#allocation7 + $0x60] sm:$0xff]
    %v61 = vld [vmem:[#allocation7 + $0x68] sm:$0x3f]
    %v62 = vld [vmem:[#allocation7 + $0x70] sm:$0xff]
    %v63 = vld [vmem:[#allocation7 + $0x78] sm:$0x3f]
    %v64 = vld [vmem:[#allocation7 + $0x80] sm:$0xff]
    %v65 = vld [vmem:[#allocation7 + $0x88] sm:$0x3f]
    %v66 = vld [vmem:[#allocation7 + $0x90] sm:$0xff]
    %v67 = vld [vmem:[#allocation7 + $0x98] sm:$0x3f]
    %v68 = vld [vmem:[#allocation7 + $0xa0] sm:$0xff]
    %v69 = vld [vmem:[#allocation7 + $0xa8] sm:$0x3f]
    %v70 = vld [vmem:[#allocation7 + $0xb0] sm:$0xff]
    %v71 = vld [vmem:[#allocation7 + $0xb8] sm:$0x3f]
    %v72 = vld [vmem:[#allocation7 + $0xc0] sm:$0xff]
    %v73 = vld [vmem:[#allocation7 + $0xc8] sm:$0x3f]
    %v74 = vld [vmem:[#allocation7 + $0xd0] sm:$0xff]
    %v75 = vld [vmem:[#allocation7 + $0xd8] sm:$0x3f]
    %v76 = vstv %s47
    %v77 = vmul.f32 %v76, %v48
    %v78 = vmul.f32 %v76, %v49
    %v79 = vmul.f32 %v76, %v50
    %v80 = vmul.f32 %v76, %v51
    %v81 = vmul.f32 %v76, %v52
    %v82 = vmul.f32 %v76, %v53
    %v83 = vmul.f32 %v76, %v54
    %v84 = vmul.f32 %v76, %v55
    %v85 = vmul.f32 %v76, %v56
    %v86 = vmul.f32 %v76, %v57
    %v87 = vmul.f32 %v76, %v58
    %v88 = vmul.f32 %v76, %v59
    %v89 = vmul.f32 %v76, %v60
    %v90 = vmul.f32 %v76, %v61
    %v91 = vmul.f32 %v76, %v62
    %v92 = vmul.f32 %v76, %v63
    %v93 = vmul.f32 %v76, %v64
    %v94 = vmul.f32 %v76, %v65
    %v95 = vmul.f32 %v76, %v66
    %v96 = vmul.f32 %v76, %v67
    %v97 = vmul.f32 %v76, %v68
    %v98 = vmul.f32 %v76, %v69
    %v99 = vmul.f32 %v76, %v70
    %v100 = vmul.f32 %v76, %v71
    %v101 = vmul.f32 %v76, %v72
    %v102 = vmul.f32 %v76, %v73
    %v103 = vmul.f32 %v76, %v74
    %v104 = vmul.f32 %v76, %v75
    %v105 = vadd.f32 %v46, %v77
    %v106 = vadd.f32 %v46, %v78
    %v107 = vadd.f32 %v46, %v79
    %v108 = vadd.f32 %v46, %v80
    %v109 = vadd.f32 %v46, %v81
    %v110 = vadd.f32 %v46, %v82
    %v111 = vadd.f32 %v46, %v83
    %v112 = vadd.f32 %v46, %v84
    %v113 = vadd.f32 %v46, %v85
    %v114 = vadd.f32 %v46, %v86
    %v115 = vadd.f32 %v46, %v87
    %v116 = vadd.f32 %v46, %v88
    %v117 = vadd.f32 %v46, %v89
    %v118 = vadd.f32 %v46, %v90
    %v119 = vadd.f32 %v46, %v91
    %v120 = vadd.f32 %v46, %v92
    %v121 = vadd.f32 %v46, %v93
    %v122 = vadd.f32 %v46, %v94
    %v123 = vadd.f32 %v46, %v95
    %v124 = vadd.f32 %v46, %v96
    %v125 = vadd.f32 %v46, %v97
    %v126 = vadd.f32 %v46, %v98
    %v127 = vadd.f32 %v46, %v99
    %v128 = vadd.f32 %v46, %v100
    %v129 = vadd.f32 %v46, %v101
    %v130 = vadd.f32 %v46, %v102
    %v131 = vadd.f32 %v46, %v103
    %v132 = vadd.f32 %v46, %v104
    %s133 = sld [smem:[#allocation3 + $0x1]]
    %v134 = vld [vmem:[#allocation7 + $0x1] sm:$0xff]
    %v135 = vld [vmem:[#allocation7 + $0x9] sm:$0x3f]
    %v136 = vld [vmem:[#allocation7 + $0x11] sm:$0xff]
    %v137 = vld [vmem:[#allocation7 + $0x19] sm:$0x3f]
    %v138 = vld [vmem:[#allocation7 + $0x21] sm:$0xff]
    %v139 = vld [vmem:[#allocation7 + $0x29] sm:$0x3f]
    %v140 = vld [vmem:[#allocation7 + $0x31] sm:$0xff]
    %v141 = vld [vmem:[#allocation7 + $0x39] sm:$0x3f]
    %v142 = vld [vmem:[#allocation7 + $0x41] sm:$0xff]
    %v143 = vld [vmem:[#allocation7 + $0x49] sm:$0x3f]
    %v144 = vld [vmem:[#allocation7 + $0x51] sm:$0xff]
    %v145 = vld [vmem:[#allocation7 + $0x59] sm:$0x3f]
    %v146 = vld [vmem:[#allocation7 + $0x61] sm:$0xff]
    %v147 = vld [vmem:[#allocation7 + $0x69] sm:$0x3f]
    %v148 = vld [vmem:[#allocation7 + $0x71] sm:$0xff]
    %v149 = vld [vmem:[#allocation7 + $0x79] sm:$0x3f]
    %v150 = vld [vmem:[#allocation7 + $0x81] sm:$0xff]
    %v151 = vld [vmem:[#allocation7 + $0x89] sm:$0x3f]
    %v152 = vld [vmem:[#allocation7 + $0x91] sm:$0xff]
    %v153 = vld [vmem:[#allocation7 + $0x99] sm:$0x3f]
    %v154 = vld [vmem:[#allocation7 + $0xa1] sm:$0xff]
    %v155 = vld [vmem:[#allocation7 + $0xa9] sm:$0x3f]
    %v156 = vld [vmem:[#allocation7 + $0xb1] sm:$0xff]
    %v157 = vld [vmem:[#allocation7 + $0xb9] sm:$0x3f]
    %v158 = vld [vmem:[#allocation7 + $0xc1] sm:$0xff]
    %v159 = vld [vmem:[#allocation7 + $0xc9] sm:$0x3f]
    %v160 = vld [vmem:[#allocation7 + $0xd1] sm:$0xff]
    %v161 = vld [vmem:[#allocation7 + $0xd9] sm:$0x3f]
    %v162 = vstv %s133
    %v163 = vmul.f32 %v162, %v134
    %v164 = vmul.f32 %v162, %v135
    %v165 = vmul.f32 %v162, %v136
    %v166 = vmul.f32 %v162, %v137
    %v167 = vmul.f32 %v162, %v138
    %v168 = vmul.f32 %v162, %v139
    %v169 = vmul.f32 %v162, %v140
    %v170 = vmul.f32 %v162, %v141
    %v171 = vmul.f32 %v162, %v142
    %v172 = vmul.f32 %v162, %v143
    %v173 = vmul.f32 %v162, %v144
    %v174 = vmul.f32 %v162, %v145
    %v175 = vmul.f32 %v162, %v146
    %v176 = vmul.f32 %v162, %v147
    %v177 = vmul.f32 %v162, %v148
    %v178 = vmul.f32 %v162, %v149
    %v179 = vmul.f32 %v162, %v150
    %v180 = vmul.f32 %v162, %v151
    %v181 = vmul.f32 %v162, %v152
    %v182 = vmul.f32 %v162, %v153
    %v183 = vmul.f32 %v162, %v154
    %v184 = vmul.f32 %v162, %v155
    %v185 = vmul.f32 %v162, %v156
    %v186 = vmul.f32 %v162, %v157
    %v187 = vmul.f32 %v162, %v158
    %v188 = vmul.f32 %v162, %v159
    %v189 = vmul.f32 %v162, %v160
    %v190 = vmul.f32 %v162, %v161
    %v191 = vadd.f32 %v105, %v163
    %v192 = vadd.f32 %v106, %v164
    %v193 = vadd.f32 %v107, %v165
    %v194 = vadd.f32 %v108, %v166
    %v195 = vadd.f32 %v109, %v167
    %v196 = vadd.f32 %v110, %v168
    %v197 = vadd.f32 %v111, %v169
    %v198 = vadd.f32 %v112, %v170
    %v199 = vadd.f32 %v113, %v171
    %v200 = vadd.f32 %v114, %v172
    %v201 = vadd.f32 %v115, %v173
    %v202 = vadd.f32 %v116, %v174
    %v203 = vadd.f32 %v117, %v175
    %v204 = vadd.f32 %v118, %v176
    %v205 = vadd.f32 %v119, %v177
    %v206 = vadd.f32 %v120, %v178
    %v207 = vadd.f32 %v121, %v179
    %v208 = vadd.f32 %v122, %v180
    %v209 = vadd.f32 %v123, %v181
    %v210 = vadd.f32 %v124, %v182
    %v211 = vadd.f32 %v125, %v183
    %v212 = vadd.f32 %v126, %v184
    %v213 = vadd.f32 %v127, %v185
    %v214 = vadd.f32 %v128, %v186
    %v215 = vadd.f32 %v129, %v187
    %v216 = vadd.f32 %v130, %v188
    %v217 = vadd.f32 %v131, %v189
    %v218 = vadd.f32 %v132, %v190
    %s219 = sld [smem:[#allocation3 + $0x2]]
    %v220 = vld [vmem:[#allocation7 + $0x2] sm:$0xff]
    %v221 = vld [vmem:[#allocation7 + $0xa] sm:$0x3f]
    %v222 = vld [vmem:[#allocation7 + $0x12] sm:$0xff]
    %v223 = vld [vmem:[#allocation7 + $0x1a] sm:$0x3f]
    %v224 = vld [vmem:[#allocation7 + $0x22] sm:$0xff]
    %v225 = vld [vmem:[#allocation7 + $0x2a] sm:$0x3f]
    %v226 = vld [vmem:[#allocation7 + $0x32] sm:$0xff]
    %v227 = vld [vmem:[#allocation7 + $0x3a] sm:$0x3f]
    %v228 = vld [vmem:[#allocation7 + $0x42] sm:$0xff]
    %v229 = vld [vmem:[#allocation7 + $0x4a] sm:$0x3f]
    %v230 = vld [vmem:[#allocation7 + $0x52] sm:$0xff]
    %v231 = vld [vmem:[#allocation7 + $0x5a] sm:$0x3f]
    %v232 = vld [vmem:[#allocation7 + $0x62] sm:$0xff]
    %v233 = vld [vmem:[#allocation7 + $0x6a] sm:$0x3f]
    %v234 = vld [vmem:[#allocation7 + $0x72] sm:$0xff]
    %v235 = vld [vmem:[#allocation7 + $0x7a] sm:$0x3f]
    %v236 = vld [vmem:[#allocation7 + $0x82] sm:$0xff]
    %v237 = vld [vmem:[#allocation7 + $0x8a] sm:$0x3f]
    %v238 = vld [vmem:[#allocation7 + $0x92] sm:$0xff]
    %v239 = vld [vmem:[#allocation7 + $0x9a] sm:$0x3f]
    %v240 = vld [vmem:[#allocation7 + $0xa2] sm:$0xff]
    %v241 = vld [vmem:[#allocation7 + $0xaa] sm:$0x3f]
    %v242 = vld [vmem:[#allocation7 + $0xb2] sm:$0xff]
    %v243 = vld [vmem:[#allocation7 + $0xba] sm:$0x3f]
    %v244 = vld [vmem:[#allocation7 + $0xc2] sm:$0xff]
    %v245 = vld [vmem:[#allocation7 + $0xca] sm:$0x3f]
    %v246 = vld [vmem:[#allocation7 + $0xd2] sm:$0xff]
    %v247 = vld [vmem:[#allocation7 + $0xda] sm:$0x3f]
    %v248 = vstv %s219
    %v249 = vmul.f32 %v248, %v220
    %v250 = vmul.f32 %v248, %v221
    %v251 = vmul.f32 %v248, %v222
    %v252 = vmul.f32 %v248, %v223
    %v253 = vmul.f32 %v248, %v224
    %v254 = vmul.f32 %v248, %v225
    %v255 = vmul.f32 %v248, %v226
    %v256 = vmul.f32 %v248, %v227
    %v257 = vmul.f32 %v248, %v228
    %v258 = vmul.f32 %v248, %v229
    %v259 = vmul.f32 %v248, %v230
    %v260 = vmul.f32 %v248, %v231
    %v261 = vmul.f32 %v248, %v232
    %v262 = vmul.f32 %v248, %v233
    %v263 = vmul.f32 %v248, %v234
    %v264 = vmul.f32 %v248, %v235
    %v265 = vmul.f32 %v248, %v236
    %v266 = vmul.f32 %v248, %v237
    %v267 = vmul.f32 %v248, %v238
    %v268 = vmul.f32 %v248, %v239
    %v269 = vmul.f32 %v248, %v240
    %v270 = vmul.f32 %v248, %v241
    %v271 = vmul.f32 %v248, %v242
    %v272 = vmul.f32 %v248, %v243
    %v273 = vmul.f32 %v248, %v244
    %v274 = vmul.f32 %v248, %v245
    %v275 = vmul.f32 %v248, %v246
    %v276 = vmul.f32 %v248, %v247
    %v277 = vadd.f32 %v191, %v249
    %v278 = vadd.f32 %v192, %v250
    %v279 = vadd.f32 %v193, %v251
    %v280 = vadd.f32 %v194, %v252
    %v281 = vadd.f32 %v195, %v253
    %v282 = vadd.f32 %v196, %v254
    %v283 = vadd.f32 %v197, %v255
    %v284 = vadd.f32 %v198, %v256
    %v285 = vadd.f32 %v199, %v257
    %v286 = vadd.f32 %v200, %v258
    %v287 = vadd.f32 %v201, %v259
    %v288 = vadd.f32 %v202, %v260
    %v289 = vadd.f32 %v203, %v261
    %v290 = vadd.f32 %v204, %v262
    %v291 = vadd.f32 %v205, %v263
    %v292 = vadd.f32 %v206, %v264
    %v293 = vadd.f32 %v207, %v265
    %v294 = vadd.f32 %v208, %v266
    %v295 = vadd.f32 %v209, %v267
    %v296 = vadd.f32 %v210, %v268
    %v297 = vadd.f32 %v211, %v269
    %v298 = vadd.f32 %v212, %v270
    %v299 = vadd.f32 %v213, %v271
    %v300 = vadd.f32 %v214, %v272
    %v301 = vadd.f32 %v215, %v273
    %v302 = vadd.f32 %v216, %v274
    %v303 = vadd.f32 %v217, %v275
    %v304 = vadd.f32 %v218, %v276
    %s305 = sld [smem:[#allocation3 + $0x3]]
    %s306 = scalar_lea.vmem [#allocation7], 16
    %v307 = vld [vmem:[%s306] sm:$0xff]
    %v308 = vld [vmem:[%s306 + $0x8] sm:$0x3f]
    %v309 = vld [vmem:[%s306 + $0x10] sm:$0xff]
    %v310 = vld [vmem:[%s306 + $0x18] sm:$0x3f]
    %v311 = vld [vmem:[%s306 + $0x20] sm:$0xff]
    %v312 = vld [vmem:[%s306 + $0x28] sm:$0x3f]
    %v313 = vld [vmem:[%s306 + $0x30] sm:$0xff]
    %v314 = vld [vmem:[%s306 + $0x38] sm:$0x3f]
    %v315 = vld [vmem:[%s306 + $0x40] sm:$0xff]
    %v316 = vld [vmem:[%s306 + $0x48] sm:$0x3f]
    %v317 = vld [vmem:[%s306 + $0x50] sm:$0xff]
    %v318 = vld [vmem:[%s306 + $0x58] sm:$0x3f]
    %v319 = vld [vmem:[%s306 + $0x60] sm:$0xff]
    %v320 = vld [vmem:[%s306 + $0x68] sm:$0x3f]
    %v321 = vld [vmem:[%s306 + $0x70] sm:$0xff]
    %v322 = vld [vmem:[%s306 + $0x78] sm:$0x3f]
    %v323 = vld [vmem:[%s306 + $0x80] sm:$0xff]
    %v324 = vld [vmem:[%s306 + $0x88] sm:$0x3f]
    %v325 = vld [vmem:[%s306 + $0x90] sm:$0xff]
    %v326 = vld [vmem:[%s306 + $0x98] sm:$0x3f]
    %v327 = vld [vmem:[%s306 + $0xa0] sm:$0xff]
    %v328 = vld [vmem:[%s306 + $0xa8] sm:$0x3f]
    %v329 = vld [vmem:[%s306 + $0xb0] sm:$0xff]
    %v330 = vld [vmem:[%s306 + $0xb8] sm:$0x3f]
    %v331 = vld [vmem:[%s306 + $0xc0] sm:$0xff]
    %v332 = vld [vmem:[%s306 + $0xc8] sm:$0x3f]
    %v333 = vld [vmem:[%s306 + $0xd0] sm:$0xff]
    %v334 = vld [vmem:[%s306 + $0xd8] sm:$0x3f]
    %v335 = vstv %s305
    %v336 = vmul.f32 %v335, %v307
    %v337 = vmul.f32 %v335, %v308
    %v338 = vmul.f32 %v335, %v309
    %v339 = vmul.f32 %v335, %v310
    %v340 = vmul.f32 %v335, %v311
    %v341 = vmul.f32 %v335, %v312
    %v342 = vmul.f32 %v335, %v313
    %v343 = vmul.f32 %v335, %v314
    %v344 = vmul.f32 %v335, %v315
    %v345 = vmul.f32 %v335, %v316
    %v346 = vmul.f32 %v335, %v317
    %v347 = vmul.f32 %v335, %v318
    %v348 = vmul.f32 %v335, %v319
    %v349 = vmul.f32 %v335, %v320
    %v350 = vmul.f32 %v335, %v321
    %v351 = vmul.f32 %v335, %v322
    %v352 = vmul.f32 %v335, %v323
    %v353 = vmul.f32 %v335, %v324
    %v354 = vmul.f32 %v335, %v325
    %v355 = vmul.f32 %v335, %v326
    %v356 = vmul.f32 %v335, %v327
    %v357 = vmul.f32 %v335, %v328
    %v358 = vmul.f32 %v335, %v329
    %v359 = vmul.f32 %v335, %v330
    %v360 = vmul.f32 %v335, %v331
    %v361 = vmul.f32 %v335, %v332
    %v362 = vmul.f32 %v335, %v333
    %v363 = vmul.f32 %v335, %v334
    %v364 = vadd.f32 %v277, %v336
    %v365 = vadd.f32 %v278, %v337
    %v366 = vadd.f32 %v279, %v338
    %v367 = vadd.f32 %v280, %v339
    %v368 = vadd.f32 %v281, %v340
    %v369 = vadd.f32 %v282, %v341
    %v370 = vadd.f32 %v283, %v342
    %v371 = vadd.f32 %v284, %v343
    %v372 = vadd.f32 %v285, %v344
    %v373 = vadd.f32 %v286, %v345
    %v374 = vadd.f32 %v287, %v346
    %v375 = vadd.f32 %v288, %v347
    %v376 = vadd.f32 %v289, %v348
    %v377 = vadd.f32 %v290, %v349
    %v378 = vadd.f32 %v291, %v350
    %v379 = vadd.f32 %v292, %v351
    %v380 = vadd.f32 %v293, %v352
    %v381 = vadd.f32 %v294, %v353
    %v382 = vadd.f32 %v295, %v354
    %v383 = vadd.f32 %v296, %v355
    %v384 = vadd.f32 %v297, %v356
    %v385 = vadd.f32 %v298, %v357
    %v386 = vadd.f32 %v299, %v358
    %v387 = vadd.f32 %v300, %v359
    %v388 = vadd.f32 %v301, %v360
    %v389 = vadd.f32 %v302, %v361
    %v390 = vadd.f32 %v303, %v362
    %v391 = vadd.f32 %v304, %v363
    %s392 = sld [smem:[#allocation3 + $0x4]]
    %v393 = vld [vmem:[%s306 + $0x1] sm:$0xff]
    %v394 = vld [vmem:[%s306 + $0x9] sm:$0x3f]
    %v395 = vld [vmem:[%s306 + $0x11] sm:$0xff]
    %v396 = vld [vmem:[%s306 + $0x19] sm:$0x3f]
    %v397 = vld [vmem:[%s306 + $0x21] sm:$0xff]
    %v398 = vld [vmem:[%s306 + $0x29] sm:$0x3f]
    %v399 = vld [vmem:[%s306 + $0x31] sm:$0xff]
    %v400 = vld [vmem:[%s306 + $0x39] sm:$0x3f]
    %v401 = vld [vmem:[%s306 + $0x41] sm:$0xff]
    %v402 = vld [vmem:[%s306 + $0x49] sm:$0x3f]
    %v403 = vld [vmem:[%s306 + $0x51] sm:$0xff]
    %v404 = vld [vmem:[%s306 + $0x59] sm:$0x3f]
    %v405 = vld [vmem:[%s306 + $0x61] sm:$0xff]
    %v406 = vld [vmem:[%s306 + $0x69] sm:$0x3f]
    %v407 = vld [vmem:[%s306 + $0x71] sm:$0xff]
    %v408 = vld [vmem:[%s306 + $0x79] sm:$0x3f]
    %v409 = vld [vmem:[%s306 + $0x81] sm:$0xff]
    %v410 = vld [vmem:[%s306 + $0x89] sm:$0x3f]
    %v411 = vld [vmem:[%s306 + $0x91] sm:$0xff]
    %v412 = vld [vmem:[%s306 + $0x99] sm:$0x3f]
    %v413 = vld [vmem:[%s306 + $0xa1] sm:$0xff]
    %v414 = vld [vmem:[%s306 + $0xa9] sm:$0x3f]
    %v415 = vld [vmem:[%s306 + $0xb1] sm:$0xff]
    %v416 = vld [vmem:[%s306 + $0xb9] sm:$0x3f]
    %v417 = vld [vmem:[%s306 + $0xc1] sm:$0xff]
    %v418 = vld [vmem:[%s306 + $0xc9] sm:$0x3f]
    %v419 = vld [vmem:[%s306 + $0xd1] sm:$0xff]
    %v420 = vld [vmem:[%s306 + $0xd9] sm:$0x3f]
    %v421 = vstv %s392
    %v422 = vmul.f32 %v421, %v393
    %v423 = vmul.f32 %v421, %v394
    %v424 = vmul.f32 %v421, %v395
    %v425 = vmul.f32 %v421, %v396
    %v426 = vmul.f32 %v421, %v397
    %v427 = vmul.f32 %v421, %v398
    %v428 = vmul.f32 %v421, %v399
    %v429 = vmul.f32 %v421, %v400
    %v430 = vmul.f32 %v421, %v401
    %v431 = vmul.f32 %v421, %v402
    %v432 = vmul.f32 %v421, %v403
    %v433 = vmul.f32 %v421, %v404
    %v434 = vmul.f32 %v421, %v405
    %v435 = vmul.f32 %v421, %v406
    %v436 = vmul.f32 %v421, %v407
    %v437 = vmul.f32 %v421, %v408
    %v438 = vmul.f32 %v421, %v409
    %v439 = vmul.f32 %v421, %v410
    %v440 = vmul.f32 %v421, %v411
    %v441 = vmul.f32 %v421, %v412
    %v442 = vmul.f32 %v421, %v413
    %v443 = vmul.f32 %v421, %v414
    %v444 = vmul.f32 %v421, %v415
    %v445 = vmul.f32 %v421, %v416
    %v446 = vmul.f32 %v421, %v417
    %v447 = vmul.f32 %v421, %v418
    %v448 = vmul.f32 %v421, %v419
    %v449 = vmul.f32 %v421, %v420
    %v450 = vadd.f32 %v364, %v422
    %v451 = vadd.f32 %v365, %v423
    %v452 = vadd.f32 %v366, %v424
    %v453 = vadd.f32 %v367, %v425
    %v454 = vadd.f32 %v368, %v426
    %v455 = vadd.f32 %v369, %v427
    %v456 = vadd.f32 %v370, %v428
    %v457 = vadd.f32 %v371, %v429
    %v458 = vadd.f32 %v372, %v430
    %v459 = vadd.f32 %v373, %v431
    %v460 = vadd.f32 %v374, %v432
    %v461 = vadd.f32 %v375, %v433
    %v462 = vadd.f32 %v376, %v434
    %v463 = vadd.f32 %v377, %v435
    %v464 = vadd.f32 %v378, %v436
    %v465 = vadd.f32 %v379, %v437
    %v466 = vadd.f32 %v380, %v438
    %v467 = vadd.f32 %v381, %v439
    %v468 = vadd.f32 %v382, %v440
    %v469 = vadd.f32 %v383, %v441
    %v470 = vadd.f32 %v384, %v442
    %v471 = vadd.f32 %v385, %v443
    %v472 = vadd.f32 %v386, %v444
    %v473 = vadd.f32 %v387, %v445
    %v474 = vadd.f32 %v388, %v446
    %v475 = vadd.f32 %v389, %v447
    %v476 = vadd.f32 %v390, %v448
    %v477 = vadd.f32 %v391, %v449
    %s478 = sld [smem:[#allocation3 + $0x5]]
    %v479 = vld [vmem:[%s306 + $0x2] sm:$0xff]
    %v480 = vld [vmem:[%s306 + $0xa] sm:$0x3f]
    %v481 = vld [vmem:[%s306 + $0x12] sm:$0xff]
    %v482 = vld [vmem:[%s306 + $0x1a] sm:$0x3f]
    %v483 = vld [vmem:[%s306 + $0x22] sm:$0xff]
    %v484 = vld [vmem:[%s306 + $0x2a] sm:$0x3f]
    %v485 = vld [vmem:[%s306 + $0x32] sm:$0xff]
    %v486 = vld [vmem:[%s306 + $0x3a] sm:$0x3f]
    %v487 = vld [vmem:[%s306 + $0x42] sm:$0xff]
    %v488 = vld [vmem:[%s306 + $0x4a] sm:$0x3f]
    %v489 = vld [vmem:[%s306 + $0x52] sm:$0xff]
    %v490 = vld [vmem:[%s306 + $0x5a] sm:$0x3f]
    %v491 = vld [vmem:[%s306 + $0x62] sm:$0xff]
    %v492 = vld [vmem:[%s306 + $0x6a] sm:$0x3f]
    %v493 = vld [vmem:[%s306 + $0x72] sm:$0xff]
    %v494 = vld [vmem:[%s306 + $0x7a] sm:$0x3f]
    %v495 = vld [vmem:[%s306 + $0x82] sm:$0xff]
    %v496 = vld [vmem:[%s306 + $0x8a] sm:$0x3f]
    %v497 = vld [vmem:[%s306 + $0x92] sm:$0xff]
    %v498 = vld [vmem:[%s306 + $0x9a] sm:$0x3f]
    %v499 = vld [vmem:[%s306 + $0xa2] sm:$0xff]
    %v500 = vld [vmem:[%s306 + $0xaa] sm:$0x3f]
    %v501 = vld [vmem:[%s306 + $0xb2] sm:$0xff]
    %v502 = vld [vmem:[%s306 + $0xba] sm:$0x3f]
    %v503 = vld [vmem:[%s306 + $0xc2] sm:$0xff]
    %v504 = vld [vmem:[%s306 + $0xca] sm:$0x3f]
    %v505 = vld [vmem:[%s306 + $0xd2] sm:$0xff]
    %v506 = vld [vmem:[%s306 + $0xda] sm:$0x3f]
    %v507 = vstv %s478
    %v508 = vmul.f32 %v507, %v479
    %v509 = vmul.f32 %v507, %v480
    %v510 = vmul.f32 %v507, %v481
    %v511 = vmul.f32 %v507, %v482
    %v512 = vmul.f32 %v507, %v483
    %v513 = vmul.f32 %v507, %v484
    %v514 = vmul.f32 %v507, %v485
    %v515 = vmul.f32 %v507, %v486
    %v516 = vmul.f32 %v507, %v487
    %v517 = vmul.f32 %v507, %v488
    %v518 = vmul.f32 %v507, %v489
    %v519 = vmul.f32 %v507, %v490
    %v520 = vmul.f32 %v507, %v491
    %v521 = vmul.f32 %v507, %v492
    %v522 = vmul.f32 %v507, %v493
    %v523 = vmul.f32 %v507, %v494
    %v524 = vmul.f32 %v507, %v495
    %v525 = vmul.f32 %v507, %v496
    %v526 = vmul.f32 %v507, %v497
    %v527 = vmul.f32 %v507, %v498
    %v528 = vmul.f32 %v507, %v499
    %v529 = vmul.f32 %v507, %v500
    %v530 = vmul.f32 %v507, %v501
    %v531 = vmul.f32 %v507, %v502
    %v532 = vmul.f32 %v507, %v503
    %v533 = vmul.f32 %v507, %v504
    %v534 = vmul.f32 %v507, %v505
    %v535 = vmul.f32 %v507, %v506
    %v536 = vadd.f32 %v450, %v508
    %v537 = vadd.f32 %v451, %v509
    %v538 = vadd.f32 %v452, %v510
    %v539 = vadd.f32 %v453, %v511
    %v540 = vadd.f32 %v454, %v512
    %v541 = vadd.f32 %v455, %v513
    %v542 = vadd.f32 %v456, %v514
    %v543 = vadd.f32 %v457, %v515
    %v544 = vadd.f32 %v458, %v516
    %v545 = vadd.f32 %v459, %v517
    %v546 = vadd.f32 %v460, %v518
    %v547 = vadd.f32 %v461, %v519
    %v548 = vadd.f32 %v462, %v520
    %v549 = vadd.f32 %v463, %v521
    %v550 = vadd.f32 %v464, %v522
    %v551 = vadd.f32 %v465, %v523
    %v552 = vadd.f32 %v466, %v524
    %v553 = vadd.f32 %v467, %v525
    %v554 = vadd.f32 %v468, %v526
    %v555 = vadd.f32 %v469, %v527
    %v556 = vadd.f32 %v470, %v528
    %v557 = vadd.f32 %v471, %v529
    %v558 = vadd.f32 %v472, %v530
    %v559 = vadd.f32 %v473, %v531
    %v560 = vadd.f32 %v474, %v532
    %v561 = vadd.f32 %v475, %v533
    %v562 = vadd.f32 %v476, %v534
    %v563 = vadd.f32 %v477, %v535
    %s564 = sld [smem:[#allocation3 + $0x6]]
    %s565 = scalar_lea.vmem [#allocation7], 32
    %v566 = vld [vmem:[%s565] sm:$0xff]
    %v567 = vld [vmem:[%s565 + $0x8] sm:$0x3f]
    %v568 = vld [vmem:[%s565 + $0x10] sm:$0xff]
    %v569 = vld [vmem:[%s565 + $0x18] sm:$0x3f]
    %v570 = vld [vmem:[%s565 + $0x20] sm:$0xff]
    %v571 = vld [vmem:[%s565 + $0x28] sm:$0x3f]
    %v572 = vld [vmem:[%s565 + $0x30] sm:$0xff]
    %v573 = vld [vmem:[%s565 + $0x38] sm:$0x3f]
    %v574 = vld [vmem:[%s565 + $0x40] sm:$0xff]
    %v575 = vld [vmem:[%s565 + $0x48] sm:$0x3f]
    %v576 = vld [vmem:[%s565 + $0x50] sm:$0xff]
    %v577 = vld [vmem:[%s565 + $0x58] sm:$0x3f]
    %v578 = vld [vmem:[%s565 + $0x60] sm:$0xff]
    %v579 = vld [vmem:[%s565 + $0x68] sm:$0x3f]
    %v580 = vld [vmem:[%s565 + $0x70] sm:$0xff]
    %v581 = vld [vmem:[%s565 + $0x78] sm:$0x3f]
    %v582 = vld [vmem:[%s565 + $0x80] sm:$0xff]
    %v583 = vld [vmem:[%s565 + $0x88] sm:$0x3f]
    %v584 = vld [vmem:[%s565 + $0x90] sm:$0xff]
    %v585 = vld [vmem:[%s565 + $0x98] sm:$0x3f]
    %v586 = vld [vmem:[%s565 + $0xa0] sm:$0xff]
    %v587 = vld [vmem:[%s565 + $0xa8] sm:$0x3f]
    %v588 = vld [vmem:[%s565 + $0xb0] sm:$0xff]
    %v589 = vld [vmem:[%s565 + $0xb8] sm:$0x3f]
    %v590 = vld [vmem:[%s565 + $0xc0] sm:$0xff]
    %v591 = vld [vmem:[%s565 + $0xc8] sm:$0x3f]
    %v592 = vld [vmem:[%s565 + $0xd0] sm:$0xff]
    %v593 = vld [vmem:[%s565 + $0xd8] sm:$0x3f]
    %v594 = vstv %s564
    %v595 = vmul.f32 %v594, %v566
    %v596 = vmul.f32 %v594, %v567
    %v597 = vmul.f32 %v594, %v568
    %v598 = vmul.f32 %v594, %v569
    %v599 = vmul.f32 %v594, %v570
    %v600 = vmul.f32 %v594, %v571
    %v601 = vmul.f32 %v594, %v572
    %v602 = vmul.f32 %v594, %v573
    %v603 = vmul.f32 %v594, %v574
    %v604 = vmul.f32 %v594, %v575
    %v605 = vmul.f32 %v594, %v576
    %v606 = vmul.f32 %v594, %v577
    %v607 = vmul.f32 %v594, %v578
    %v608 = vmul.f32 %v594, %v579
    %v609 = vmul.f32 %v594, %v580
    %v610 = vmul.f32 %v594, %v581
    %v611 = vmul.f32 %v594, %v582
    %v612 = vmul.f32 %v594, %v583
    %v613 = vmul.f32 %v594, %v584
    %v614 = vmul.f32 %v594, %v585
    %v615 = vmul.f32 %v594, %v586
    %v616 = vmul.f32 %v594, %v587
    %v617 = vmul.f32 %v594, %v588
    %v618 = vmul.f32 %v594, %v589
    %v619 = vmul.f32 %v594, %v590
    %v620 = vmul.f32 %v594, %v591
    %v621 = vmul.f32 %v594, %v592
    %v622 = vmul.f32 %v594, %v593
    %v623 = vadd.f32 %v536, %v595
    %v624 = vadd.f32 %v537, %v596
    %v625 = vadd.f32 %v538, %v597
    %v626 = vadd.f32 %v539, %v598
    %v627 = vadd.f32 %v540, %v599
    %v628 = vadd.f32 %v541, %v600
    %v629 = vadd.f32 %v542, %v601
    %v630 = vadd.f32 %v543, %v602
    %v631 = vadd.f32 %v544, %v603
    %v632 = vadd.f32 %v545, %v604
    %v633 = vadd.f32 %v546, %v605
    %v634 = vadd.f32 %v547, %v606
    %v635 = vadd.f32 %v548, %v607
    %v636 = vadd.f32 %v549, %v608
    %v637 = vadd.f32 %v550, %v609
    %v638 = vadd.f32 %v551, %v610
    %v639 = vadd.f32 %v552, %v611
    %v640 = vadd.f32 %v553, %v612
    %v641 = vadd.f32 %v554, %v613
    %v642 = vadd.f32 %v555, %v614
    %v643 = vadd.f32 %v556, %v615
    %v644 = vadd.f32 %v557, %v616
    %v645 = vadd.f32 %v558, %v617
    %v646 = vadd.f32 %v559, %v618
    %v647 = vadd.f32 %v560, %v619
    %v648 = vadd.f32 %v561, %v620
    %v649 = vadd.f32 %v562, %v621
    %v650 = vadd.f32 %v563, %v622
    %s651 = sld [smem:[#allocation3 + $0x7]]
    %v652 = vld [vmem:[%s565 + $0x1] sm:$0xff]
    %v653 = vld [vmem:[%s565 + $0x9] sm:$0x3f]
    %v654 = vld [vmem:[%s565 + $0x11] sm:$0xff]
    %v655 = vld [vmem:[%s565 + $0x19] sm:$0x3f]
    %v656 = vld [vmem:[%s565 + $0x21] sm:$0xff]
    %v657 = vld [vmem:[%s565 + $0x29] sm:$0x3f]
    %v658 = vld [vmem:[%s565 + $0x31] sm:$0xff]
    %v659 = vld [vmem:[%s565 + $0x39] sm:$0x3f]
    %v660 = vld [vmem:[%s565 + $0x41] sm:$0xff]
    %v661 = vld [vmem:[%s565 + $0x49] sm:$0x3f]
    %v662 = vld [vmem:[%s565 + $0x51] sm:$0xff]
    %v663 = vld [vmem:[%s565 + $0x59] sm:$0x3f]
    %v664 = vld [vmem:[%s565 + $0x61] sm:$0xff]
    %v665 = vld [vmem:[%s565 + $0x69] sm:$0x3f]
    %v666 = vld [vmem:[%s565 + $0x71] sm:$0xff]
    %v667 = vld [vmem:[%s565 + $0x79] sm:$0x3f]
    %v668 = vld [vmem:[%s565 + $0x81] sm:$0xff]
    %v669 = vld [vmem:[%s565 + $0x89] sm:$0x3f]
    %v670 = vld [vmem:[%s565 + $0x91] sm:$0xff]
    %v671 = vld [vmem:[%s565 + $0x99] sm:$0x3f]
    %v672 = vld [vmem:[%s565 + $0xa1] sm:$0xff]
    %v673 = vld [vmem:[%s565 + $0xa9] sm:$0x3f]
    %v674 = vld [vmem:[%s565 + $0xb1] sm:$0xff]
    %v675 = vld [vmem:[%s565 + $0xb9] sm:$0x3f]
    %v676 = vld [vmem:[%s565 + $0xc1] sm:$0xff]
    %v677 = vld [vmem:[%s565 + $0xc9] sm:$0x3f]
    %v678 = vld [vmem:[%s565 + $0xd1] sm:$0xff]
    %v679 = vld [vmem:[%s565 + $0xd9] sm:$0x3f]
    %v680 = vstv %s651
    %v681 = vmul.f32 %v680, %v652
    %v682 = vmul.f32 %v680, %v653
    %v683 = vmul.f32 %v680, %v654
    %v684 = vmul.f32 %v680, %v655
    %v685 = vmul.f32 %v680, %v656
    %v686 = vmul.f32 %v680, %v657
    %v687 = vmul.f32 %v680, %v658
    %v688 = vmul.f32 %v680, %v659
    %v689 = vmul.f32 %v680, %v660
    %v690 = vmul.f32 %v680, %v661
    %v691 = vmul.f32 %v680, %v662
    %v692 = vmul.f32 %v680, %v663
    %v693 = vmul.f32 %v680, %v664
    %v694 = vmul.f32 %v680, %v665
    %v695 = vmul.f32 %v680, %v666
    %v696 = vmul.f32 %v680, %v667
    %v697 = vmul.f32 %v680, %v668
    %v698 = vmul.f32 %v680, %v669
    %v699 = vmul.f32 %v680, %v670
    %v700 = vmul.f32 %v680, %v671
    %v701 = vmul.f32 %v680, %v672
    %v702 = vmul.f32 %v680, %v673
    %v703 = vmul.f32 %v680, %v674
    %v704 = vmul.f32 %v680, %v675
    %v705 = vmul.f32 %v680, %v676
    %v706 = vmul.f32 %v680, %v677
    %v707 = vmul.f32 %v680, %v678
    %v708 = vmul.f32 %v680, %v679
    %v709 = vadd.f32 %v623, %v681
    %v710 = vadd.f32 %v624, %v682
    %v711 = vadd.f32 %v625, %v683
    %v712 = vadd.f32 %v626, %v684
    %v713 = vadd.f32 %v627, %v685
    %v714 = vadd.f32 %v628, %v686
    %v715 = vadd.f32 %v629, %v687
    %v716 = vadd.f32 %v630, %v688
    %v717 = vadd.f32 %v631, %v689
    %v718 = vadd.f32 %v632, %v690
    %v719 = vadd.f32 %v633, %v691
    %v720 = vadd.f32 %v634, %v692
    %v721 = vadd.f32 %v635, %v693
    %v722 = vadd.f32 %v636, %v694
    %v723 = vadd.f32 %v637, %v695
    %v724 = vadd.f32 %v638, %v696
    %v725 = vadd.f32 %v639, %v697
    %v726 = vadd.f32 %v640, %v698
    %v727 = vadd.f32 %v641, %v699
    %v728 = vadd.f32 %v642, %v700
    %v729 = vadd.f32 %v643, %v701
    %v730 = vadd.f32 %v644, %v702
    %v731 = vadd.f32 %v645, %v703
    %v732 = vadd.f32 %v646, %v704
    %v733 = vadd.f32 %v647, %v705
    %v734 = vadd.f32 %v648, %v706
    %v735 = vadd.f32 %v649, %v707
    %v736 = vadd.f32 %v650, %v708
    %s737 = sld [smem:[#allocation3 + $0x8]]
    %v738 = vld [vmem:[%s565 + $0x2] sm:$0xff]
    %v739 = vld [vmem:[%s565 + $0xa] sm:$0x3f]
    %v740 = vld [vmem:[%s565 + $0x12] sm:$0xff]
    %v741 = vld [vmem:[%s565 + $0x1a] sm:$0x3f]
    %v742 = vld [vmem:[%s565 + $0x22] sm:$0xff]
    %v743 = vld [vmem:[%s565 + $0x2a] sm:$0x3f]
    %v744 = vld [vmem:[%s565 + $0x32] sm:$0xff]
    %v745 = vld [vmem:[%s565 + $0x3a] sm:$0x3f]
    %v746 = vld [vmem:[%s565 + $0x42] sm:$0xff]
    %v747 = vld [vmem:[%s565 + $0x4a] sm:$0x3f]
    %v748 = vld [vmem:[%s565 + $0x52] sm:$0xff]
    %v749 = vld [vmem:[%s565 + $0x5a] sm:$0x3f]
    %v750 = vld [vmem:[%s565 + $0x62] sm:$0xff]
    %v751 = vld [vmem:[%s565 + $0x6a] sm:$0x3f]
    %v752 = vld [vmem:[%s565 + $0x72] sm:$0xff]
    %v753 = vld [vmem:[%s565 + $0x7a] sm:$0x3f]
    %v754 = vld [vmem:[%s565 + $0x82] sm:$0xff]
    %v755 = vld [vmem:[%s565 + $0x8a] sm:$0x3f]
    %v756 = vld [vmem:[%s565 + $0x92] sm:$0xff]
    %v757 = vld [vmem:[%s565 + $0x9a] sm:$0x3f]
    %v758 = vld [vmem:[%s565 + $0xa2] sm:$0xff]
    %v759 = vld [vmem:[%s565 + $0xaa] sm:$0x3f]
    %v760 = vld [vmem:[%s565 + $0xb2] sm:$0xff]
    %v761 = vld [vmem:[%s565 + $0xba] sm:$0x3f]
    %v762 = vld [vmem:[%s565 + $0xc2] sm:$0xff]
    %v763 = vld [vmem:[%s565 + $0xca] sm:$0x3f]
    %v764 = vld [vmem:[%s565 + $0xd2] sm:$0xff]
    %v765 = vld [vmem:[%s565 + $0xda] sm:$0x3f]
    %v766 = vstv %s737
    %v767 = vmul.f32 %v766, %v738
    %v768 = vmul.f32 %v766, %v739
    %v769 = vmul.f32 %v766, %v740
    %v770 = vmul.f32 %v766, %v741
    %v771 = vmul.f32 %v766, %v742
    %v772 = vmul.f32 %v766, %v743
    %v773 = vmul.f32 %v766, %v744
    %v774 = vmul.f32 %v766, %v745
    %v775 = vmul.f32 %v766, %v746
    %v776 = vmul.f32 %v766, %v747
    %v777 = vmul.f32 %v766, %v748
    %v778 = vmul.f32 %v766, %v749
    %v779 = vmul.f32 %v766, %v750
    %v780 = vmul.f32 %v766, %v751
    %v781 = vmul.f32 %v766, %v752
    %v782 = vmul.f32 %v766, %v753
    %v783 = vmul.f32 %v766, %v754
    %v784 = vmul.f32 %v766, %v755
    %v785 = vmul.f32 %v766, %v756
    %v786 = vmul.f32 %v766, %v757
    %v787 = vmul.f32 %v766, %v758
    %v788 = vmul.f32 %v766, %v759
    %v789 = vmul.f32 %v766, %v760
    %v790 = vmul.f32 %v766, %v761
    %v791 = vmul.f32 %v766, %v762
    %v792 = vmul.f32 %v766, %v763
    %v793 = vmul.f32 %v766, %v764
    %v794 = vmul.f32 %v766, %v765
    %v795 = vadd.f32 %v709, %v767
    %v796 = vadd.f32 %v710, %v768
    %v797 = vadd.f32 %v711, %v769
    %v798 = vadd.f32 %v712, %v770
    %v799 = vadd.f32 %v713, %v771
    %v800 = vadd.f32 %v714, %v772
    %v801 = vadd.f32 %v715, %v773
    %v802 = vadd.f32 %v716, %v774
    %v803 = vadd.f32 %v717, %v775
    %v804 = vadd.f32 %v718, %v776
    %v805 = vadd.f32 %v719, %v777
    %v806 = vadd.f32 %v720, %v778
    %v807 = vadd.f32 %v721, %v779
    %v808 = vadd.f32 %v722, %v780
    %v809 = vadd.f32 %v723, %v781
    %v810 = vadd.f32 %v724, %v782
    %v811 = vadd.f32 %v725, %v783
    %v812 = vadd.f32 %v726, %v784
    %v813 = vadd.f32 %v727, %v785
    %v814 = vadd.f32 %v728, %v786
    %v815 = vadd.f32 %v729, %v787
    %v816 = vadd.f32 %v730, %v788
    %v817 = vadd.f32 %v731, %v789
    %v818 = vadd.f32 %v732, %v790
    %v819 = vadd.f32 %v733, %v791
    %v820 = vadd.f32 %v734, %v792
    %v821 = vadd.f32 %v735, %v793
    %v822 = vadd.f32 %v736, %v794
    %823 = vst [vmem:[#allocation8] sm:$0xff] %v795
    %824 = vst [vmem:[#allocation8 + $0x8] sm:$0x3f] %v796
    %825 = vst [vmem:[#allocation8 + $0x10] sm:$0xff] %v797
    %826 = vst [vmem:[#allocation8 + $0x18] sm:$0x3f] %v798
    %827 = vst [vmem:[#allocation8 + $0x20] sm:$0xff] %v799
    %828 = vst [vmem:[#allocation8 + $0x28] sm:$0x3f] %v800
    %829 = vst [vmem:[#allocation8 + $0x30] sm:$0xff] %v801
    %830 = vst [vmem:[#allocation8 + $0x38] sm:$0x3f] %v802
    %831 = vst [vmem:[#allocation8 + $0x40] sm:$0xff] %v803
    %832 = vst [vmem:[#allocation8 + $0x48] sm:$0x3f] %v804
    %833 = vst [vmem:[#allocation8 + $0x50] sm:$0xff] %v805
    %834 = vst [vmem:[#allocation8 + $0x58] sm:$0x3f] %v806
    %835 = vst [vmem:[#allocation8 + $0x60] sm:$0xff] %v807
    %836 = vst [vmem:[#allocation8 + $0x68] sm:$0x3f] %v808
    %837 = vst [vmem:[#allocation8 + $0x70] sm:$0xff] %v809
    %838 = vst [vmem:[#allocation8 + $0x78] sm:$0x3f] %v810
    %839 = vst [vmem:[#allocation8 + $0x80] sm:$0xff] %v811
    %840 = vst [vmem:[#allocation8 + $0x88] sm:$0x3f] %v812
    %841 = vst [vmem:[#allocation8 + $0x90] sm:$0xff] %v813
    %842 = vst [vmem:[#allocation8 + $0x98] sm:$0x3f] %v814
    %843 = vst [vmem:[#allocation8 + $0xa0] sm:$0xff] %v815
    %844 = vst [vmem:[#allocation8 + $0xa8] sm:$0x3f] %v816
    %845 = vst [vmem:[#allocation8 + $0xb0] sm:$0xff] %v817
    %846 = vst [vmem:[#allocation8 + $0xb8] sm:$0x3f] %v818
    %847 = vst [vmem:[#allocation8 + $0xc0] sm:$0xff] %v819
    %848 = vst [vmem:[#allocation8 + $0xc8] sm:$0x3f] %v820
    %849 = vst [vmem:[#allocation8 + $0xd0] sm:$0xff] %v821
    %850 = vst [vmem:[#allocation8 + $0xd8] sm:$0x3f] %v822
    // Predicated region
    $region22: #{tpu_custom_call.1} parent=1 // pred_check
      _
    $region23: #{tpu_custom_call.1} parent=1 // pred_check_branch
      %852 = sbr.rel (0) target = $region25
    $region24: #{tpu_custom_call.1} parent=1 // pred_region
      %854 = vsyncadd [#allocation5], 0
      %s855 = sshll.u32 [#allocation8], 4
      %s856 = int_to_ptr.vmem [resolvable:$true] %s855
      %s857 = sshll.u32 %s3, 4
      %s858 = int_to_ptr.hbm [resolvable:$true] %s857
      %863 = dma.vmem_to_hbm [thread:$0]  %s856, 3584, %s858, [#allocation5], 128, 128, 8
    $region25: #{tpu_custom_call.1} parent=1 // pred_fallthru
      _
    // Predicated region
    $region26: #{tpu_custom_call.1} parent=1 // pred_check
      _
    $region27: #{tpu_custom_call.1} parent=1 // pred_check_branch
      %865 = sbr.rel (0) target = $region29
    $region28: #{tpu_custom_call.1} parent=1 // pred_region
      %867 = dma.done [#allocation5], 3584
    $region29: #{tpu_custom_call.1} parent=1 // pred_fallthru
      _
    %868 = vsyncpa [#allocation4], 1
    %869 = vsyncpa [#allocation5], 1
    %870 = vsyncpa [#allocation6], 1

</llo_original>
